<compile_context>
chip_gen: v5e
topology: v5e:2x2
jax: 0.10.0
libtpu: 0.0.40
codegen_flags: <defaults>
</compile_context>

<pallas_src>
import functools

import jax
import jax.numpy as jnp
from jax.experimental import pallas as pl
from jax.experimental.pallas import tpu as pltpu

_LANE = 128
_SUBLANE = 8
# Largest batch tile (rows). With dim_in/dim_out_padded up to a few hundred
# lanes, 512-row f32 tiles (double-buffered) stay well under the scoped VMEM
# limit on every generation, including v7x's 64 MiB physical VMEM.
_MAX_BLOCK_BATCH = 512


def _round_up(x: int, m: int) -> int:
    return ((x + m - 1) // m) * m


def _lowrank_kernel(x_ref, w_ref, vt_ref, b_ref, o_ref, *, activation):
    # Two chained MXU matmuls + f32 bias/activation epilogue, all VMEM resident.
    x = x_ref[...]                                                   # [TB, dim_in]
    h = jnp.dot(x, w_ref[...], preferred_element_type=jnp.float32)   # [TB, r]
    out = jnp.dot(h, vt_ref[...], preferred_element_type=jnp.float32)  # [TB, dim_out_p]
    out = out + b_ref[...].astype(jnp.float32)                       # broadcast bias (f32)
    if activation == "relu":
        out = jnp.maximum(out, 0.0)
    # 'linear' -> identity
    o_ref[...] = out.astype(o_ref.dtype)


def lowrank_forward(x, U, S, V, b, *, activation="relu", block_batch=None):
    """activation(X @ U @ S @ V.T + b) via a fused, batch-tiled Pallas kernel.

    Weight prep (done once in XLA, outside the kernel):
      W   = U @ S            -> removes the rank x rank MXU pass from the kernel
      V_T = V.T              -> avoids per-grid-step in-kernel transpose
      pad dim_out to 128k    -> lane-dense output stores (sliced off afterwards)
    """
    batch, dim_in = x.shape
    dim_out, r = V.shape
    assert U.shape == (dim_in, r)
    assert S.shape == (r, r)
    assert b.shape == (dim_out,)

    # --- one-time weight prep (plain XLA ops on small weights) -----------------
    W = jnp.dot(U, S).astype(x.dtype)          # [dim_in, r]
    Vt = V.T.astype(x.dtype)                   # [r, dim_out]

    dim_out_p = _round_up(max(dim_out, _LANE), _LANE)
    if dim_out_p != dim_out:
        pad = dim_out_p - dim_out
        Vt = jnp.pad(Vt, ((0, 0), (0, pad)))
        b_p = jnp.pad(b, (0, pad))
    else:
        b_p = b
    b2d = b_p.reshape(1, dim_out_p).astype(jnp.float32)  # keep epilogue bias in f32

    # --- batch tiling -----------------------------------------------------------
    if block_batch is None:
        block_batch = min(_MAX_BLOCK_BATCH, _round_up(batch, _SUBLANE))
    grid = (pl.cdiv(batch, block_batch),)

    kernel = functools.partial(_lowrank_kernel, activation=activation)

    flops = 2 * batch * dim_in * r + 2 * batch * r * dim_out_p + 2 * batch * dim_out_p
    bytes_accessed = (
        x.size * x.dtype.itemsize
        + W.size * W.dtype.itemsize
        + Vt.size * Vt.dtype.itemsize
        + b2d.size * 4
        + batch * dim_out_p * x.dtype.itemsize
    )

    out_p = pl.pallas_call(
        kernel,
        out_shape=jax.ShapeDtypeStruct((batch, dim_out_p), x.dtype),
        grid=grid,
        in_specs=[
            pl.BlockSpec((block_batch, dim_in), lambda i: (i, 0)),  # X: tiled over batch
            pl.BlockSpec((dim_in, r), lambda i: (0, 0)),            # W = U@S: resident
            pl.BlockSpec((r, dim_out_p), lambda i: (0, 0)),         # V^T: resident
            pl.BlockSpec((1, dim_out_p), lambda i: (0, 0)),         # bias: resident
        ],
        out_specs=pl.BlockSpec((block_batch, dim_out_p), lambda i: (i, 0)),
        compiler_params=pltpu.CompilerParams(
            dimension_semantics=("parallel",),   # batch tiles shard across TCs (v7x)
        ),
        cost_estimate=pl.CostEstimate(
            flops=flops, transcendentals=0, bytes_accessed=bytes_accessed
        ),
    )(x, W, Vt, b2d)

    # Slice off the lane padding added for dense stores.
    return out_p[:, :dim_out] if dim_out_p != dim_out else out_p


def init_lowrank_params(key, dim_in, dim_out, rank, dtype=jnp.float32):
    """Deterministic synthetic init mirroring LowRank.__init__:
    U, V ~ randn then orthonormalized via reduced QR; S, b ~ randn."""
    ku, ks, kv, kb = jax.random.split(key, 4)
    U = jax.random.normal(ku, (dim_in, rank), dtype)
    S = jax.random.normal(ks, (rank, rank), dtype)
    V = jax.random.normal(kv, (dim_out, rank), dtype)
    b = jax.random.normal(kb, (dim_out,), dtype)
    U, _ = jnp.linalg.qr(U, mode="reduced")
    V, _ = jnp.linalg.qr(V, mode="reduced")
    return U, S, V, b


# TODO(synk): LowRank.step() (QR-based low-rank retraction update) is a training-time
# optimizer step, not part of the forward pass; it is not implemented as a kernel.

if __name__ == "__main__":
    # Small config consistent with the module: dim_in=32, dim_out=16, rank=8.
    batch, dim_in, dim_out, rank = 8, 32, 16, 8

    key = jax.random.PRNGKey(0)
    kx, kp = jax.random.split(key)
    x = jax.random.normal(kx, (batch, dim_in), jnp.float32)
    U, S, V, b = init_lowrank_params(kp, dim_in, dim_out, rank)

    out = lowrank_forward(x, U, S, V, b, activation="relu")
    out = jax.block_until_ready(out)

    # Pure-JAX reference check (same math as the PyTorch forward).
    ref = jnp.maximum(((x @ U) @ S) @ V.T + b, 0.0)
    assert out.shape == (batch, dim_out)
    assert jnp.allclose(out, ref, atol=1e-4, rtol=1e-5), float(
        jnp.max(jnp.abs(out - ref))
    )

    print("KERNEL_OK")
</pallas_src>

<mosaic_0001>
module attributes {stable_mosaic.version = 11 : i64} {
  func.func @_lowrank_kernel(%arg0: i32, %arg1: memref<8x32xf32, #tpu.memory_space<vmem>>, %arg2: memref<32x8xf32, #tpu.memory_space<vmem>>, %arg3: memref<8x128xf32, #tpu.memory_space<vmem>>, %arg4: memref<1x128xf32, #tpu.memory_space<vmem>>, %arg5: memref<8x128xf32, #tpu.memory_space<vmem>>) attributes {dimension_semantics = [#tpu.dimension_semantics<parallel>], iteration_bounds = array<i64: 1>, scalar_prefetch = 0 : i64, scratch_operands = 0 : i64, tpu.core_type = #tpu.core_type<tc>, window_params = [{transform_indices = @transform_0, window_bounds = array<i64: 8, 32>}, {pipeline_mode = #tpu.pipeline_mode<synchronous>, transform_indices = @transform_1, window_bounds = array<i64: 32, 8>}, {pipeline_mode = #tpu.pipeline_mode<synchronous>, transform_indices = @transform_2, window_bounds = array<i64: 8, 128>}, {pipeline_mode = #tpu.pipeline_mode<synchronous>, transform_indices = @transform_3, window_bounds = array<i64: 1, 128>}, {transform_indices = @transform_4, window_bounds = array<i64: 8, 128>}]} {
    %c0 = arith.constant 0 : index
    %c0_0 = arith.constant 0 : index
    %0 = vector.load %arg1[%c0, %c0_0] : memref<8x32xf32, #tpu.memory_space<vmem>>, vector<8x32xf32>
    %c0_1 = arith.constant 0 : index
    %c0_2 = arith.constant 0 : index
    %1 = vector.load %arg2[%c0_1, %c0_2] : memref<32x8xf32, #tpu.memory_space<vmem>>, vector<32x8xf32>
    %cst = arith.constant dense<0.000000e+00> : vector<8x8xf32>
    %2 = tpu.matmul %0, %1, %cst {dimension_numbers = #tpu.dot_dimension_numbers<[1], [0], [0], [1], [0, 0, 1, 1], [], []>} : vector<8x32xf32>, vector<32x8xf32>, vector<8x8xf32> -> vector<8x8xf32>
    %c0_3 = arith.constant 0 : index
    %c0_4 = arith.constant 0 : index
    %3 = vector.load %arg3[%c0_3, %c0_4] : memref<8x128xf32, #tpu.memory_space<vmem>>, vector<8x128xf32>
    %cst_5 = arith.constant dense<0.000000e+00> : vector<8x128xf32>
    %4 = tpu.matmul %2, %3, %cst_5 {dimension_numbers = #tpu.dot_dimension_numbers<[1], [0], [0], [1], [0, 0, 1, 1], [], []>} : vector<8x8xf32>, vector<8x128xf32>, vector<8x128xf32> -> vector<8x128xf32>
    %c0_6 = arith.constant 0 : index
    %c0_7 = arith.constant 0 : index
    %5 = vector.load %arg4[%c0_6, %c0_7] : memref<1x128xf32, #tpu.memory_space<vmem>>, vector<1x128xf32>
    %6 = vector.broadcast %5 : vector<1x128xf32> to vector<8x128xf32>
    %7 = arith.addf %4, %6 : vector<8x128xf32>
    %cst_8 = arith.constant 0.000000e+00 : f32
    %8 = vector.broadcast %cst_8 : f32 to vector<8x128xf32>
    %9 = arith.maximumf %7, %8 : vector<8x128xf32>
    %c0_9 = arith.constant 0 : index
    %c0_10 = arith.constant 0 : index
    %10 = vector.load %arg5[%c0_9, %c0_10] : memref<8x128xf32, #tpu.memory_space<vmem>>, vector<8x128xf32>
    tpu.vector_store %arg5[%c0_9, %c0_10], %9 {strides = array<i32>} : memref<8x128xf32, #tpu.memory_space<vmem>>, vector<8x128xf32>,
    return
  }
  func.func @transform_0(%arg0: i32) -> (i32, i32) {
    %c0_i32 = arith.constant 0 : i32
    %c0_i32_0 = arith.constant 0 : i32
    return %arg0, %c0_i32 : i32, i32
  }
  func.func @transform_1(%arg0: i32) -> (i32, i32) {
    %c0_i32 = arith.constant 0 : i32
    %c0_i32_0 = arith.constant 0 : i32
    %c0_i32_1 = arith.constant 0 : i32
    return %c0_i32, %c0_i32_0 : i32, i32
  }
  func.func @transform_2(%arg0: i32) -> (i32, i32) {
    %c0_i32 = arith.constant 0 : i32
    %c0_i32_0 = arith.constant 0 : i32
    %c0_i32_1 = arith.constant 0 : i32
    return %c0_i32, %c0_i32_0 : i32, i32
  }
  func.func @transform_3(%arg0: i32) -> (i32, i32) {
    %c0_i32 = arith.constant 0 : i32
    %c0_i32_0 = arith.constant 0 : i32
    %c0_i32_1 = arith.constant 0 : i32
    return %c0_i32, %c0_i32_0 : i32, i32
  }
  func.func @transform_4(%arg0: i32) -> (i32, i32) {
    %c0_i32 = arith.constant 0 : i32
    %c0_i32_0 = arith.constant 0 : i32
    return %arg0, %c0_i32 : i32, i32
  }
}

</mosaic_0001>

<llo_original>
// kernel: tpu_custom_call.1
$region0: #{tpu_custom_call.1}
  #allocation0 [shape = 'u32[]', space=smem, size = 0x4, offset = 0x4, fixed_abs, tag = 'smem constant byte address 0x4 - core index']
  #allocation1 [shape = 'u32[72,128]{1,0:T(1,128)}', space=vmem, size = 0x9000, scoped, tag = 'internal scratch']
  %s0 = inlined_call_operand.vmem [shape: f32[8,32], index: 0, kind: input, shape index: {}]
  %s1 = inlined_call_operand.vmem [shape: f32[32,8], index: 1, kind: input, shape index: {}]
  %s2 = inlined_call_operand.vmem [shape: f32[8,128], index: 2, kind: input, shape index: {}]
  %s3 = inlined_call_operand.vmem [shape: f32[1,128], index: 3, kind: input, shape index: {}]
  %s4 = inlined_call_operand.hbm [shape: f32[8,128], index: 4, kind: output, shape index: {}]
  %s5 = sld [smem:[#allocation0]]
  $region26: #{tpu_custom_call.1} parent=0
    _
  %s7 = ssub.s32 1, %s5
  %s8 = scalar_select 0, %s7, %s5
  $region1: #{tpu_custom_call.1} parent=0
    #allocation2 [shape = 'u8[4096]{0}', space=vmem, size = 0x1000, scoped, tag = 'output window, operand 0, single buffered']
    #allocation3 [shape = 's32[1]{0}', space=sflag, size = 0x4, scoped, tag = 'scoped memory for tpu_custom_call.1']
    %9 = vsyncpa [#allocation3], 0
    // Predicated region
    $region2: #{tpu_custom_call.1} parent=1 // pred_check
      _
    $region3: #{tpu_custom_call.1} parent=1 // pred_check_branch
      %11 = sbr.rel (0) target = $region5
    $region4: #{tpu_custom_call.1} parent=1 // pred_region
      _
    $region5: #{tpu_custom_call.1} parent=1 // pred_fallthru
      _
    // Predicated region
    $region6: #{tpu_custom_call.1} parent=1 // pred_check
      _
    $region7: #{tpu_custom_call.1} parent=1 // pred_check_branch
      %13 = sbr.rel (0) target = $region9
    $region8: #{tpu_custom_call.1} parent=1 // pred_region
      _
    $region9: #{tpu_custom_call.1} parent=1 // pred_fallthru
      _
    // Predicated region
    $region10: #{tpu_custom_call.1} parent=1 // pred_check
      _
    $region11: #{tpu_custom_call.1} parent=1 // pred_check_branch
      %15 = sbr.rel (0) target = $region13
    $region12: #{tpu_custom_call.1} parent=1 // pred_region
      _
    $region13: #{tpu_custom_call.1} parent=1 // pred_fallthru
      _
    // Predicated region
    $region14: #{tpu_custom_call.1} parent=1 // pred_check
      _
    $region15: #{tpu_custom_call.1} parent=1 // pred_check_branch
      %17 = sbr.rel (0) target = $region17
    $region16: #{tpu_custom_call.1} parent=1 // pred_region
      _
    $region17: #{tpu_custom_call.1} parent=1 // pred_fallthru
      _
    %v18 = vld [vmem:[%s0] sm:$0xff]
    %v19 = vld [vmem:[%s1] sm:$0xff]
    %v20 = vld [vmem:[%s1 + $0x8] sm:$0xff]
    %v21 = vld [vmem:[%s1 + $0x10] sm:$0xff]
    %v22 = vld [vmem:[%s1 + $0x18] sm:$0xff]
    %vm23 = vcmask 261120
    %v25 = vsel %vm23, %v18, 0
    %27 = vmatpush.msra.mxu0 0.0
    %28 = vmatpush.msra.mxu0 0.0
    %29 = vmatpush.msra.mxu0 0.0
    %30 = vmatpush.msra.mxu0 0.0
    %31 = vmatpush.msra.mxu0 0.0
    %32 = vmatpush.msra.mxu0 0.0
    %33 = vmatpush.msra.mxu0 0.0
    %34 = vmatpush.msra.mxu0 0.0
    %35 = vmatpush.msra.mxu0 0.0
    %36 = vmatpush.msra.mxu0 0.0
    %37 = vmatpush.msra.mxu0 0.0
    %38 = vmatpush.msra.mxu0 0.0
    %39 = vmatpush.msra.mxu0 %v22
    %40 = vmatpush.msra.mxu0 %v21
    %41 = vmatpush.msra.mxu0 %v20
    %42 = vmatpush.msra.mxu0 %v19
    %43 = vmatmul.f32.gmra.mxu0 %v25
    %v44 = vpop.f32.mrf.mxu0
    %v45 = vadd.f32 0.0, %v44
    %46 = vdwg.mxu0
    %v47 = vld [vmem:[%s2] sm:$0xff]
    %v48 = vld [vmem:[%s3] sm:$0x1]
    %v50 = vperm.slane %v48, 0
    %vm52 = vcmask 64512
    %v54 = vsel %vm52, %v45, 0
    %56 = vmatpush.msra.mxu0 0.0
    %57 = vmatpush.msra.mxu0 0.0
    %58 = vmatpush.msra.mxu0 0.0
    %59 = vmatpush.msra.mxu0 0.0
    %60 = vmatpush.msra.mxu0 0.0
    %61 = vmatpush.msra.mxu0 0.0
    %62 = vmatpush.msra.mxu0 0.0
    %63 = vmatpush.msra.mxu0 0.0
    %64 = vmatpush.msra.mxu0 0.0
    %65 = vmatpush.msra.mxu0 0.0
    %66 = vmatpush.msra.mxu0 0.0
    %67 = vmatpush.msra.mxu0 0.0
    %68 = vmatpush.msra.mxu0 0.0
    %69 = vmatpush.msra.mxu0 0.0
    %70 = vmatpush.msra.mxu0 0.0
    %71 = vmatpush.msra.mxu0 %v47
    %72 = vmatmul.f32.gmra.mxu0 %v54
    %v73 = vpop.f32.mrf.mxu0
    %v74 = vadd.f32 %v50, %v73
    %75 = vdwg.mxu0
    %v76 = vmax.f32 %v74, 0.0
    %77 = vst [vmem:[#allocation2] sm:$0xff] %v76
    // Predicated region
    $region18: #{tpu_custom_call.1} parent=1 // pred_check
      _
    $region19: #{tpu_custom_call.1} parent=1 // pred_check_branch
      %79 = sbr.rel (0) target = $region21
    $region20: #{tpu_custom_call.1} parent=1 // pred_region
      %81 = vsyncadd [#allocation3], 0
      %s83 = sshll.u32 [#allocation2], 4
      %s84 = int_to_ptr.vmem [resolvable:$true] %s83
      %s85 = sshll.u32 %s4, 4
      %s86 = int_to_ptr.hbm [resolvable:$true] %s85
      %88 = dma.vmem_to_hbm [thread:$0]  %s84, 128, %s86, [#allocation3]
    $region21: #{tpu_custom_call.1} parent=1 // pred_fallthru
      _
    // Predicated region
    $region22: #{tpu_custom_call.1} parent=1 // pred_check
      _
    $region23: #{tpu_custom_call.1} parent=1 // pred_check_branch
      %90 = sbr.rel (0) target = $region25
    $region24: #{tpu_custom_call.1} parent=1 // pred_region
      %92 = dma.done [#allocation3], 128
    $region25: #{tpu_custom_call.1} parent=1 // pred_fallthru
      _
    %93 = vsyncpa [#allocation3], 1

</llo_original>
